<compile_context>
chip_gen: v7x
topology: tpu7x:2x2x1
jax: 0.10.0
libtpu: 0.0.40
codegen_flags: <defaults>
</compile_context>

<pallas_src>
import jax
import jax.numpy as jnp
from jax.experimental import pallas as pl
from jax.experimental.pallas import tpu as pltpu


# ----------------------------- Pallas kernel -------------------------------

def deconv_matmul_kernel(x_ref, w_ref, b_ref, o_ref):
    # x_ref: (Cin,  TP)   pixels on the 128-lane axis (lane-dense, unmasked vld/vst)
    # w_ref: (Mp,  Cin)   folded (kd, kh, co) taps on the M axis (resident across grid)
    # b_ref: (Mp,   1)    f32 bias, broadcast across lanes
    # o_ref: (Mp,  TP)    bf16 (or input dtype) — f32 accumulate, cast in epilogue
    acc = jnp.dot(w_ref[...], x_ref[...], preferred_element_type=jnp.float32)
    o_ref[...] = (acc + b_ref[...]).astype(o_ref.dtype)


# ------------------------------- wrapper ------------------------------------

def _round_up(a, b):
    return (a + b - 1) // b * b


def _choose_pixel_tile(P, tile_px, min_grid_steps=2):
    """Lane-dense pixel tile: multiple of 128, big, but keeps >= min_grid_steps steps."""
    tile_px = max(128, _round_up(tile_px, 128))
    # Cap so the 'parallel' grid axis has at least `min_grid_steps` steps (feeds both
    # TensorCores on v7x); never below one 128-lane vreg width.
    cap = max(128, _round_up(pl.cdiv(P, min_grid_steps), 128))
    TP = min(tile_px, cap)
    Pp = _round_up(P, TP)
    return TP, Pp


def deconv_block_forward(x_ncdhw, weight, bias, *, tile_px=2048, use_bf16=True,
                         out_dtype=None):
    """ConvTranspose3d(k=(s,s,1), stride=(s,s,1), pad=0) forward, NCDHW in/out.

    use_bf16=True  -> bf16 MXU inputs + bf16 kernel writeback (f32 accumulation);
                      set False for bit-faithful f32 end to end.
    out_dtype      -> final output dtype (default: x.dtype, matching the PyTorch module).
    """
    N, Cin, D, H, W = x_ncdhw.shape
    cin_w, Cout, sd, sh, sw = weight.shape
    assert cin_w == Cin and sw == 1 and sd == sh
    s = sd
    out_dtype = x_ncdhw.dtype if out_dtype is None else out_dtype

    # ---- layout plumbing (XLA glue): channel-major pixel slab, pixels on lanes
    P = N * D * H * W
    x_cp = jnp.transpose(x_ncdhw, (1, 0, 2, 3, 4)).reshape(Cin, P)

    # Fold (kd, kh, co) into the matmul M dimension: row r = (kd*s + kh)*Cout + co
    M = s * s * Cout
    w_mat = jnp.transpose(weight[..., 0], (2, 3, 1, 0)).reshape(M, Cin)
    b_col = jnp.tile(bias, s * s).reshape(M, 1).astype(jnp.float32)

    compute_dtype = jnp.bfloat16 if use_bf16 else x_ncdhw.dtype
    x_cp = x_cp.astype(compute_dtype)
    w_mat = w_mat.astype(compute_dtype)

    # Pad M to a multiple of 8 sublanes (zero rows, sliced off after the kernel).
    Mp = _round_up(M, 8)
    if Mp != M:
        w_mat = jnp.pad(w_mat, ((0, Mp - M), (0, 0)))
        b_col = jnp.pad(b_col, ((0, Mp - M), (0, 0)))

    # Lane-dense pixel tile; pad the pixel axis so it divides exactly (no dropped rows).
    TP, Pp = _choose_pixel_tile(P, tile_px)
    if Pp != P:
        x_cp = jnp.pad(x_cp, ((0, 0), (0, Pp - P)))

    y = pl.pallas_call(
        deconv_matmul_kernel,
        out_shape=jax.ShapeDtypeStruct((Mp, Pp), compute_dtype),
        grid=(Pp // TP,),
        in_specs=[
            pl.BlockSpec((Cin, TP), lambda i: (0, i)),   # pixel tile (lane-dense)
            pl.BlockSpec((Mp, Cin), lambda i: (0, 0)),   # weights (resident)
            pl.BlockSpec((Mp, 1), lambda i: (0, 0)),     # bias    (resident)
        ],
        out_specs=pl.BlockSpec((Mp, TP), lambda i: (0, i)),
        compiler_params=pltpu.CompilerParams(
            dimension_semantics=("parallel",),
        ),
    )(x_cp, w_mat, b_col)

    # ---- scatter (kd, kh) taps into the upsampled grid.  Runs on the narrow (bf16)
    # kernel output (half the bytes of the previous f32 version); the final cast back to
    # out_dtype is fused by XLA into the same transpose copy.
    y = y[:M, :P].reshape(s, s, Cout, N, D, H, W)            # (a, b, o, n, d, h, w)
    out = jnp.transpose(y, (3, 2, 4, 0, 5, 1, 6))            # (n, o, d, a, h, b, w)
    out = out.reshape(N, Cout, s * D, s * H, W)
    return out.astype(out_dtype)


# --------------------------- pure-JAX reference ------------------------------

def reference_forward(x, weight, bias):
    N, Cin, D, H, W = x.shape
    _, Cout, s, _, _ = weight.shape
    y = jnp.einsum('ncdhw,coab->nodahbw', x, weight[..., 0])
    y = y.reshape(N, Cout, s * D, s * H, W)
    return y + bias.reshape(1, Cout, 1, 1, 1)


# --------------------------------- main --------------------------------------

if __name__ == "__main__":
    N, Cin, Cout, D, H, W, scale = 2, 4, 8, 8, 8, 8, 2

    key = jax.random.PRNGKey(0)
    kx, kw, kb = jax.random.split(key, 3)
    x = jax.random.normal(kx, (N, Cin, D, H, W), jnp.float32)        # NCDHW like PyTorch
    bound = 1.0 / (Cin * scale * scale) ** 0.5                        # PyTorch-style init scale
    weight = jax.random.uniform(kw, (Cin, Cout, scale, scale, 1), jnp.float32, -bound, bound)
    bias = jax.random.uniform(kb, (Cout,), jnp.float32, -bound, bound)

    fwd = jax.jit(deconv_block_forward)
    out = jax.block_until_ready(fwd(x, weight, bias))
    ref = jax.block_until_ready(reference_forward(x, weight, bias))

    assert out.shape == (N, Cout, scale * D, scale * H, W)
    assert out.dtype == x.dtype
    # bf16 matmul inputs + bf16 kernel writeback (f32 accumulation) -> bf16-sized tolerance.
    assert jnp.allclose(out, ref, atol=2e-2, rtol=2e-2), "mismatch vs pure-JAX reference"

    print("KERNEL_OK")
</pallas_src>

<mosaic_0001>
module attributes {stable_mosaic.version = 11 : i64} {
  func.func @deconv_matmul_kernel(%arg0: i32, %arg1: memref<4x512xbf16, #tpu.memory_space<vmem>>, %arg2: memref<32x4xbf16, #tpu.memory_space<vmem>>, %arg3: memref<32x1xf32, #tpu.memory_space<vmem>>, %arg4: memref<32x512xbf16, #tpu.memory_space<vmem>>) attributes {dimension_semantics = [#tpu.dimension_semantics<parallel>], iteration_bounds = array<i64: 2>, scalar_prefetch = 0 : i64, scratch_operands = 0 : i64, tpu.core_type = #tpu.core_type<tc>, window_params = [{transform_indices = @transform_0, window_bounds = array<i64: 4, 512>}, {pipeline_mode = #tpu.pipeline_mode<synchronous>, transform_indices = @transform_1, window_bounds = array<i64: 32, 4>}, {pipeline_mode = #tpu.pipeline_mode<synchronous>, transform_indices = @transform_2, window_bounds = array<i64: 32, 1>}, {transform_indices = @transform_3, window_bounds = array<i64: 32, 512>}]} {
    %c0 = arith.constant 0 : index
    %c0_0 = arith.constant 0 : index
    %0 = vector.load %arg2[%c0, %c0_0] : memref<32x4xbf16, #tpu.memory_space<vmem>>, vector<32x4xbf16>
    %c0_1 = arith.constant 0 : index
    %c0_2 = arith.constant 0 : index
    %1 = vector.load %arg1[%c0_1, %c0_2] : memref<4x512xbf16, #tpu.memory_space<vmem>>, vector<4x512xbf16>
    %cst = arith.constant dense<0.000000e+00> : vector<32x512xf32>
    %2 = tpu.matmul %0, %1, %cst {dimension_numbers = #tpu.dot_dimension_numbers<[1], [0], [0], [1], [0, 0, 1, 1], [], []>} : vector<32x4xbf16>, vector<4x512xbf16>, vector<32x512xf32> -> vector<32x512xf32>
    %c0_3 = arith.constant 0 : index
    %c0_4 = arith.constant 0 : index
    %3 = vector.load %arg3[%c0_3, %c0_4] : memref<32x1xf32, #tpu.memory_space<vmem>>, vector<32x1xf32>
    %4 = vector.broadcast %3 : vector<32x1xf32> to vector<32x512xf32>
    %5 = arith.addf %2, %4 : vector<32x512xf32>
    %6 = arith.truncf %5 : vector<32x512xf32> to vector<32x512xbf16>
    %c0_5 = arith.constant 0 : index
    %c0_6 = arith.constant 0 : index
    %7 = vector.load %arg4[%c0_5, %c0_6] : memref<32x512xbf16, #tpu.memory_space<vmem>>, vector<32x512xbf16>
    tpu.vector_store %arg4[%c0_5, %c0_6], %6 {strides = array<i32>} : memref<32x512xbf16, #tpu.memory_space<vmem>>, vector<32x512xbf16>,
    return
  }
  func.func @transform_0(%arg0: i32) -> (i32, i32) {
    %c0_i32 = arith.constant 0 : i32
    %c0_i32_0 = arith.constant 0 : i32
    return %c0_i32, %arg0 : i32, i32
  }
  func.func @transform_1(%arg0: i32) -> (i32, i32) {
    %c0_i32 = arith.constant 0 : i32
    %c0_i32_0 = arith.constant 0 : i32
    %c0_i32_1 = arith.constant 0 : i32
    return %c0_i32, %c0_i32_0 : i32, i32
  }
  func.func @transform_2(%arg0: i32) -> (i32, i32) {
    %c0_i32 = arith.constant 0 : i32
    %c0_i32_0 = arith.constant 0 : i32
    %c0_i32_1 = arith.constant 0 : i32
    return %c0_i32, %c0_i32_0 : i32, i32
  }
  func.func @transform_3(%arg0: i32) -> (i32, i32) {
    %c0_i32 = arith.constant 0 : i32
    %c0_i32_0 = arith.constant 0 : i32
    return %c0_i32, %arg0 : i32, i32
  }
}

</mosaic_0001>

<llo_original>
// kernel: tile.8
$region0: #{tile.8}
  #allocation2 [shape = 's32[1]{0}', space=sflag, size = 0x4, scoped, tag = 'scoped memory for tile.8']
  %s0 = inlined_call_operand.hbm [shape: f32[8], index: 0, kind: input, shape index: {}]
  %s1 = inlined_call_operand.vmem [shape: f32[4,8], index: 1, kind: output, shape index: {}]
  $region1: #{tile.8} parent=0
    #allocation0 [shape = 'u8[512]{0}', space=vmem, size = 0x400, scoped, tag = 'operand span for operand 0']
    #allocation1 [shape = 's32[1]{0}', space=sflag, size = 0x4, scoped, tag = 'scoped memory for tile.8']
    %2 = vsyncpa [#allocation1], 0
    // Predicated region
    $region2: #{tile.8} parent=1 // pred_check
      _
    $region3: #{tile.8} parent=1 // pred_check_branch
      %4 = sbr.rel (0) target = $region5
    $region4: #{tile.8} parent=1 // pred_region
      %s6 = ssub.s32 16, 16
      %7 = vsyncadd [#allocation1], %s6
      %s9 = sshll.u32 [#allocation0], 4
      %s10 = int_to_ptr.vmem [resolvable:$true] %s9
      %12 = dma.hbm_to_vmem [thread:$0]  %s0, 16, %s10, [#allocation1]
    $region5: #{tile.8} parent=1 // pred_fallthru
      _
    // Predicated region
    $region6: #{tile.8} parent=1 // pred_check
      _
    $region7: #{tile.8} parent=1 // pred_check_branch
      %14 = sbr.rel (0) target = $region9
    $region8: #{tile.8} parent=1 // pred_region
      %15 = dma.done [#allocation1], 16
    $region9: #{tile.8} parent=1 // pred_fallthru
      _
    %v16 = vld [vmem:[#allocation0] ss:$0 sm:$0xff]
    %17 = vst [vmem:[%s1] sm:$0xf] %v16
    %18 = vsyncpa [#allocation1], 1

// kernel: tile.0
$region0: #{tile.0}
  %s0 = inlined_call_operand.vmem [shape: f32[4,8], index: 0, kind: input, shape index: {}]
  %s1 = inlined_call_operand.vmem [shape: f32[32,1], index: 1, kind: output, shape index: {}]
  $region1: #{tile.0} parent=0
    #allocation0 [shape = 'u8[4096]{0}', space=vmem, size = 0x1000, scoped, tag = 'scoped mem for input reshape']
    %s3 = sshllo.u32 0, 4
    %v4 = vld [vmem:[%s0] sm:%s3]
    %5 = vst [vmem:[#allocation0] sm:%s3] %v4
    %v6 = vld [vmem:[#allocation0] sm:$0xf]
    %vm7 = vcmask 7168
    %8 = vst.msk [vmem:[%s1] ss:$8 sm:$0xf] %vm7, %v6
    %v9 = vld [vmem:[#allocation0] sm:$0xf]
    %10 = vrot.lane.b32.xlu0 %v9, 127
    %v11 = vpop.permute.xlu0 %10
    %vm12 = vcmask 7168
    %s13 = scalar_lea.vmem %s1, 1
    %14 = vst.msk [vmem:[%s13] ss:$8 sm:$0xf] %vm12, %v11
    %v15 = vld [vmem:[#allocation0] sm:$0xf]
    %16 = vrot.lane.b32.xlu0 %v15, 126
    %v17 = vpop.permute.xlu0 %16
    %vm18 = vcmask 7168
    %s19 = scalar_lea.vmem %s1, 2
    %20 = vst.msk [vmem:[%s19] ss:$8 sm:$0xf] %vm18, %v17
    %v21 = vld [vmem:[#allocation0] sm:$0xf]
    %22 = vrot.lane.b32.xlu0 %v21, 125
    %v23 = vpop.permute.xlu0 %22
    %vm24 = vcmask 7168
    %s25 = scalar_lea.vmem %s1, 3
    %26 = vst.msk [vmem:[%s25] ss:$8 sm:$0xf] %vm24, %v23
    %v27 = vld [vmem:[#allocation0] sm:$0xf]
    %28 = vrot.lane.b32.xlu0 %v27, 124
    %v29 = vpop.permute.xlu0 %28
    %vm30 = vcmask 7168
    %s31 = scalar_lea.vmem %s1, 4
    %32 = vst.msk [vmem:[%s31] ss:$8 sm:$0xf] %vm30, %v29
    %v33 = vld [vmem:[#allocation0] sm:$0xf]
    %34 = vrot.lane.b32.xlu0 %v33, 123
    %v35 = vpop.permute.xlu0 %34
    %vm36 = vcmask 7168
    %s37 = scalar_lea.vmem %s1, 5
    %38 = vst.msk [vmem:[%s37] ss:$8 sm:$0xf] %vm36, %v35
    %v39 = vld [vmem:[#allocation0] sm:$0xf]
    %40 = vrot.lane.b32.xlu0 %v39, 122
    %v41 = vpop.permute.xlu0 %40
    %vm42 = vcmask 7168
    %s43 = scalar_lea.vmem %s1, 6
    %44 = vst.msk [vmem:[%s43] ss:$8 sm:$0xf] %vm42, %v41
    %v45 = vld [vmem:[#allocation0] sm:$0xf]
    %46 = vrot.lane.b32.xlu0 %v45, 121
    %v47 = vpop.permute.xlu0 %46
    %vm48 = vcmask 7168
    %s49 = scalar_lea.vmem %s1, 7
    %50 = vst.msk [vmem:[%s49] ss:$8 sm:$0xf] %vm48, %v47

// kernel: deconv_block_forward.1
$region0: #{deconv_block_forward.1}
  #allocation0 [shape = 'u32[]', space=smem, size = 0x4, offset = 0x4, fixed_abs, tag = 'smem constant byte address 0x4 - core index']
  #allocation1 [shape = 'u32[144,128]{1,0:T(1,128)}', space=vmem, size = 0x12000, scoped, tag = 'internal scratch']
  %s0 = inlined_call_operand.vmem [shape: bf16[4,1024], index: 0, kind: input, shape index: {}]
  %s1 = inlined_call_operand.vmem [shape: bf16[32,4], index: 1, kind: input, shape index: {}]
  %s2 = inlined_call_operand.vmem [shape: f32[32,1], index: 2, kind: input, shape index: {}]
  %s3 = inlined_call_operand.vmem [shape: bf16[32,1024], index: 3, kind: output, shape index: {}]
  %s4 = sld [smem:[#allocation0]]
  $region64: #{deconv_block_forward.1} parent=0
    _
  %s6 = ssub.s32 1, %s4
  %s7 = scalar_select 0, %s6, %s4
  $region1: #{deconv_block_forward.1} parent=0
    #allocation2 [shape = 'u8[65536]{0}', space=vmem, size = 0x10000, scoped, tag = 'output window, operand 0']
    loop: start=0, step=1, limit=4
    $region2: #{deconv_block_forward.1} parent=1 // loop_pre_header
      _
    $region3: #{deconv_block_forward.1} parent=1 // loop_header
      %s9 = sphi 0, %s13
      %p10 = scmp.ge.s32.totalorder %s9, 4
      %s19 = sphi 0, %s21
      %s22 = sphi 0, %s19
      %s23 = sphi 0, %s22
      %s39 = sphi 0, %s23
      %s43 = sphi 0, %s43
      %s45 = sphi 0, %s43
      %s46 = sphi 0, %s45
      %s60 = sphi 0, %s46
      %s64 = sphi 0, %s64
      %s66 = sphi 0, %s64
      %s67 = sphi 0, %s66
      %s81 = sphi 0, %s67
      %s87 = sphi 0, %s89
      %s90 = sphi 0, %s87
      %s91 = sphi 0, %s90
      %s107 = sphi 0, %s91
    $region4: #{deconv_block_forward.1} parent=1 // loop_header_branch
      %12 = sbr.rel (%p10) target = $region8
    $region5: #{deconv_block_forward.1} parent=1 // loop_body
      %s14 = ssub.s32 %s9, 1
      %s15 = ssub.s32 %s9, 2
      %s16 = sadd.s32 %s9, 1
      %s17 = ssub.s32 %s9, %s16
      %p18 = scmp.eq.s32.totalorder %s17, 0
      %s20 = sadd.s32 %s19, 1
      %s21 = scalar_select %p18, %s19, %s20
      %p24 = pneg %p18
      %p25 = scmp.eq.s32.totalorder %s9, 1
      %p26 = por %p24, %p25
      %p27 = scmp.ne.s32.totalorder %s19, %s22
      %p28 = scmp.eq.s32.totalorder %s9, 0
      %p29 = por %p27, %p28
      %p30 = scmp.ne.s32.totalorder %s19, %s22
      %p31 = scmp.eq.s32.totalorder %s14, 1
      %p32 = por %p30, %p31
      %p33 = scmp.ne.s32.totalorder %s22, %s23
      %p34 = scmp.eq.s32.totalorder %s14, 0
      %p35 = por %p33, %p34
      %p36 = scmp.ne.s32.totalorder %s22, %s23
      %p37 = scmp.eq.s32.totalorder %s15, 1
      %p38 = por %p36, %p37
      %p40 = scmp.ne.s32.totalorder %s23, %s39
      %p41 = scmp.eq.s32.totalorder %s15, 0
      %p42 = por %p40, %p41
      %s44 = sadd.s32 %s43, 1
      %p47 = scmp.eq.s32.totalorder %s9, 1
      %p48 = scmp.ne.s32.totalorder %s43, %s45
      %p49 = scmp.eq.s32.totalorder %s9, 0
      %p50 = por %p48, %p49
      %p51 = scmp.ne.s32.totalorder %s43, %s45
      %p52 = scmp.eq.s32.totalorder %s14, 1
      %p53 = por %p51, %p52
      %p54 = scmp.ne.s32.totalorder %s45, %s46
      %p55 = scmp.eq.s32.totalorder %s14, 0
      %p56 = por %p54, %p55
      %p57 = scmp.ne.s32.totalorder %s45, %s46
      %p58 = scmp.eq.s32.totalorder %s15, 1
      %p59 = por %p57, %p58
      %p61 = scmp.ne.s32.totalorder %s46, %s60
      %p62 = scmp.eq.s32.totalorder %s15, 0
      %p63 = por %p61, %p62
      %s65 = sadd.s32 %s64, 1
      %p68 = scmp.eq.s32.totalorder %s9, 1
      %p69 = scmp.ne.s32.totalorder %s64, %s66
      %p70 = scmp.eq.s32.totalorder %s9, 0
      %p71 = por %p69, %p70
      %p72 = scmp.ne.s32.totalorder %s64, %s66
      %p73 = scmp.eq.s32.totalorder %s14, 1
      %p74 = por %p72, %p73
      %p75 = scmp.ne.s32.totalorder %s66, %s67
      %p76 = scmp.eq.s32.totalorder %s14, 0
      %p77 = por %p75, %p76
      %p78 = scmp.ne.s32.totalorder %s66, %s67
      %p79 = scmp.eq.s32.totalorder %s15, 1
      %p80 = por %p78, %p79
      %p82 = scmp.ne.s32.totalorder %s67, %s81
      %p83 = scmp.eq.s32.totalorder %s15, 0
      %p84 = por %p82, %p83
      %s85 = ssub.s32 %s9, %s16
      %p86 = scmp.eq.s32.totalorder %s85, 0
      %s88 = sadd.s32 %s87, 1
      %s89 = scalar_select %p86, %s87, %s88
      %p92 = pneg %p86
      %p93 = scmp.eq.s32.totalorder %s9, 1
      %p94 = por %p92, %p93
      %p95 = scmp.ne.s32.totalorder %s87, %s90
      %p96 = scmp.eq.s32.totalorder %s9, 0
      %p97 = por %p95, %p96
      %p98 = scmp.ne.s32.totalorder %s87, %s90
      %p99 = scmp.eq.s32.totalorder %s14, 1
      %p100 = por %p98, %p99
      %p101 = scmp.ne.s32.totalorder %s90, %s91
      %p102 = scmp.eq.s32.totalorder %s14, 0
      %p103 = por %p101, %p102
      %p104 = scmp.ne.s32.totalorder %s90, %s91
      %p105 = scmp.eq.s32.totalorder %s15, 1
      %p106 = por %p104, %p105
      %p108 = scmp.ne.s32.totalorder %s91, %s107
      %p109 = scmp.eq.s32.totalorder %s15, 0
      %p110 = por %p108, %p109
      %p111 = scmp.le.s32.totalorder 1, %s9
      %p112 = scmp.lt.s32.totalorder %s9, 3
      %p113 = pnand %p111, %p112
      %p114 = pneg %p113
      // Predicated region
      $region9: #{deconv_block_forward.1} parent=5 // pred_check
        _
      $region10: #{deconv_block_forward.1} parent=5 // pred_check_branch
        %116 = sbr.rel (%p113) target = $region12
      $region11: #{deconv_block_forward.1} parent=5 // pred_region
        %s117 = ssub.s32 %s9, 1
        // Predicated region
        $region13: #{deconv_block_forward.1} parent=11 // pred_check
          %p118 = pneg %p56
        $region14: #{deconv_block_forward.1} parent=11 // pred_check_branch
          %120 = sbr.rel (%p118) target = $region16
        $region15: #{deconv_block_forward.1} parent=11 // pred_region
          _
        $region16: #{deconv_block_forward.1} parent=11 // pred_fallthru
          _
        // Predicated region
        $region17: #{deconv_block_forward.1} parent=11 // pred_check
          %p121 = pneg %p77
        $region18: #{deconv_block_forward.1} parent=11 // pred_check_branch
          %123 = sbr.rel (%p121) target = $region20
        $region19: #{deconv_block_forward.1} parent=11 // pred_region
          _
        $region20: #{deconv_block_forward.1} parent=11 // pred_fallthru
          _
      $region12: #{deconv_block_forward.1} parent=5 // pred_fallthru
        _
      %p124 = scmp.lt.s32.totalorder %s9, 2
      // Predicated region
      $region21: #{deconv_block_forward.1} parent=5 // pred_check
        %p125 = pneg %p124
      $region22: #{deconv_block_forward.1} parent=5 // pred_check_branch
        %127 = sbr.rel (%p125) target = $region24
      $region23: #{deconv_block_forward.1} parent=5 // pred_region
        // Predicated region
        $region25: #{deconv_block_forward.1} parent=23 // pred_check
          %p128 = pneg %p29
        $region26: #{deconv_block_forward.1} parent=23 // pred_check_branch
          %130 = sbr.rel (%p128) target = $region28
        $region27: #{deconv_block_forward.1} parent=23 // pred_region
          %s131 = smul.u32 4, %s9
          %p132 = scmp.lt.s32.totalorder %s131, 7
          %s133 = scalar_select %p132, %s131, 7
          %s134 = smul.addr %s133, 2
          %s135 = scalar_lea.vmem %s0, %s134
          %s136 = smul.u32 4, %s9
        $region28: #{deconv_block_forward.1} parent=23 // pred_fallthru
          _
      $region24: #{deconv_block_forward.1} parent=5 // pred_fallthru
        _
      %p137 = scmp.le.s32.totalorder 1, %s9
      %p138 = scmp.lt.s32.totalorder %s9, 3
      %p139 = pnand %p137, %p138
      %p140 = pneg %p139
      // Predicated region
      $region29: #{deconv_block_forward.1} parent=5 // pred_check
        _
      $region30: #{deconv_block_forward.1} parent=5 // pred_check_branch
        %142 = sbr.rel (%p139) target = $region32
      $region31: #{deconv_block_forward.1} parent=5 // pred_region
        %s143 = ssub.s32 %s9, 1
        %s144 = smul.u32 4, %s14
        %p145 = scmp.lt.s32.totalorder %s144, 7
        %s146 = scalar_select %p145, %s144, 7
        %s147 = smul.addr %s146, 2
        %s148 = scalar_lea.vmem %s0, %s147
        %p149 = pneg %p35
        %p150 = pneg %p32
        %p151 = pneg %p56
        %p152 = pneg %p53
        %p153 = pneg %p77
        %p154 = pneg %p74
        %p155 = pneg %p103
        %p156 = pneg %p100
        %s157 = sand.u32 %s90, 1
        %s158 = sand.u32 %s90, 1
        %s159 = smul.addr %s158, 64
        %s160 = scalar_lea.vmem [#allocation2], %s159
        %s161 = smul.u32 4, %s14
        %p162 = scmp.lt.s32.totalorder %s161, 7
        %s163 = scalar_select %p162, %s161, 7
        %s164 = smul.addr %s163, 2
        %s165 = scalar_lea.vmem %s0, %s164
        %s166 = smul.u32 4, %s14
        %s167 = smul.u32 4, %s14
        %v169 = vld [vmem:[%s1] sm:$0xf]
        %v170 = vld [vmem:[%s1 + $0x4] sm:$0xf]
        %v171 = vld [vmem:[%s1 + $0x8] sm:$0xf]
        %v172 = vld [vmem:[%s1 + $0xc] sm:$0xf]
        %v173 = vld [vmem:[%s165] sm:$0xff]
        %v174 = vld [vmem:[%s2] sm:$0xff]
        %v175 = vld [vmem:[%s2 + $0x8] sm:$0xff]
        %v176 = vld [vmem:[%s2 + $0x10] sm:$0xff]
        %v177 = vld [vmem:[%s2 + $0x18] sm:$0xff]
        %179 = vset.pattern.permute.xlu0 0
        %180 = vperm.xlu0 %179, %v174
        %v181 = vpop.permute.xlu0 %180
        %184 = vset.pattern.permute.xlu0 0
        %185 = vperm.xlu0 %184, %v175
        %v186 = vpop.permute.xlu0 %185
        %189 = vset.pattern.permute.xlu0 0
        %190 = vperm.xlu0 %189, %v176
        %v191 = vpop.permute.xlu0 %190
        %194 = vset.pattern.permute.xlu0 0
        %195 = vperm.xlu0 %194, %v177
        %v196 = vpop.permute.xlu0 %195
        %v202 = vunpack.c.l.b16 %v169
        %v203 = vunpack.c.l.b16 %v170
        %v204 = vunpack.c.l.b16 %v171
        %v205 = vunpack.c.l.b16 %v172
        %v206 = vpack.c.b16 %v203, %v202
        %v207 = vpack.c.b16 %v205, %v204
        %v209 = vcombine.high %v173, %v173
        %v211 = vunpack.c.l.s4 1983009808
        %v212 = vunpack.c.0.s8 %v211
        %v213 = vlaneseq
        %v214 = vshrl.u32 %v213, 7
        %v215 = vsub.s32 %v212, %v214
        %v216 = vrot.slane %v173, %v215
        %v218 = vunpack.c.l.s4 1983009808
        %v219 = vunpack.c.0.s8 %v218
        %v220 = vlaneseq
        %v221 = vshrl.u32 %v220, 7
        %v222 = vsub.s32 %v219, %v221
        %v223 = vrot.slane %v209, %v222
        %v224 = vcombine.high %v216, %v216
        %v225 = vcombine.high %v223, %v223
        %vm226 = vcmask 31744
        %v228 = vsel %vm226, %v206, 0
        %v231 = vsel %vm226, %v207, 0
        %vm233 = vcmask 1041408
        %v235 = vsel %vm233, %v216, 0
        %v238 = vsel %vm233, %v224, 0
        %v241 = vsel %vm233, %v223, 0
        %v244 = vsel %vm233, %v225, 0
        %246 = vmatprep.subr.bf16.mxu0 %v238
        %247 = vmatpush1.bf16.msra.mxu0 %v235
        %248 = vmatprep.subr.bf16.mxu0 0
        %249 = vmatpush1.bf16.msra.mxu0 0
        %250 = vmatprep.subr.bf16.mxu0 0
        %251 = vmatpush1.bf16.msra.mxu0 0
        %252 = vmatprep.subr.bf16.mxu0 0
        %253 = vmatpush1.bf16.msra.mxu0 0
        %254 = vmatprep.subr.bf16.mxu0 0
        %255 = vmatpush1.bf16.msra.mxu0 0
        %256 = vmatprep.subr.bf16.mxu0 0
        %257 = vmatpush1.bf16.msra.mxu0 0
        %258 = vmatprep.subr.bf16.mxu0 0
        %259 = vmatpush1.bf16.msra.mxu0 0
        %260 = vmatprep.subr.bf16.mxu0 0
        %261 = vmatpush1.bf16.msra.mxu0 0
        %262 = vmatprep.subr.bf16.mxu0 0
        %263 = vmatpush1.bf16.msra.mxu0 0
        %264 = vmatprep.subr.bf16.mxu0 0
        %265 = vmatpush1.bf16.msra.mxu0 0
        %266 = vmatprep.subr.bf16.mxu0 0
        %267 = vmatpush1.bf16.msra.mxu0 0
        %268 = vmatprep.subr.bf16.mxu0 0
        %269 = vmatpush1.bf16.msra.mxu0 0
        %270 = vmatprep.subr.bf16.mxu0 0
        %271 = vmatpush1.bf16.msra.mxu0 0
        %272 = vmatprep.subr.bf16.mxu0 0
        %273 = vmatpush1.bf16.msra.mxu0 0
        %274 = vmatprep.subr.bf16.mxu0 0
        %275 = vmatpush1.bf16.msra.mxu0 0
        %276 = vmatprep.subr.bf16.mxu0 0
        %277 = vmatpush1.bf16.msra.mxu0 0
        %278 = vmatprep.mubr.bf16.mxu0 0
        %279 = vmatmul.mubr.bf16.gmra.mrb[0].mxu0 %v228
        %v280 = vpop.f32.mrb[0].mxu0
        %v281 = vadd.f32 %v181, %v280
        %v282 = vpop.f32.mrb[0].mxu0
        %v283 = vadd.f32 %v181, %v282
        %v284 = vpop.f32.mrb[0].mxu0
        %v285 = vadd.f32 %v186, %v284
        %v286 = vpop.f32.mrb[0].mxu0
        %v287 = vadd.f32 %v186, %v286
        %288 = vmatprep.mubr.bf16.mxu0 0
        %289 = vmatmul.mubr.bf16.gmra.mrb[0].mxu0 %v231
        %v290 = vpop.f32.mrb[0].mxu0
        %v291 = vadd.f32 %v191, %v290
        %v292 = vpop.f32.mrb[0].mxu0
        %v293 = vadd.f32 %v191, %v292
        %v294 = vpop.f32.mrb[0].mxu0
        %v295 = vadd.f32 %v196, %v294
        %v296 = vpop.f32.mrb[0].mxu0
        %v297 = vadd.f32 %v196, %v296
        %298 = vdwg.mxu0
        %299 = vmatprep.subr.bf16.mxu0 %v244
        %300 = vmatpush1.bf16.msra.mxu0 %v241
        %301 = vmatprep.subr.bf16.mxu0 0
        %302 = vmatpush1.bf16.msra.mxu0 0
        %303 = vmatprep.subr.bf16.mxu0 0
        %304 = vmatpush1.bf16.msra.mxu0 0
        %305 = vmatprep.subr.bf16.mxu0 0
        %306 = vmatpush1.bf16.msra.mxu0 0
        %307 = vmatprep.subr.bf16.mxu0 0
        %308 = vmatpush1.bf16.msra.mxu0 0
        %309 = vmatprep.subr.bf16.mxu0 0
        %310 = vmatpush1.bf16.msra.mxu0 0
        %311 = vmatprep.subr.bf16.mxu0 0
        %312 = vmatpush1.bf16.msra.mxu0 0
        %313 = vmatprep.subr.bf16.mxu0 0
        %314 = vmatpush1.bf16.msra.mxu0 0
        %315 = vmatprep.subr.bf16.mxu0 0
        %316 = vmatpush1.bf16.msra.mxu0 0
        %317 = vmatprep.subr.bf16.mxu0 0
        %318 = vmatpush1.bf16.msra.mxu0 0
        %319 = vmatprep.subr.bf16.mxu0 0
        %320 = vmatpush1.bf16.msra.mxu0 0
        %321 = vmatprep.subr.bf16.mxu0 0
        %322 = vmatpush1.bf16.msra.mxu0 0
        %323 = vmatprep.subr.bf16.mxu0 0
        %324 = vmatpush1.bf16.msra.mxu0 0
        %325 = vmatprep.subr.bf16.mxu0 0
        %326 = vmatpush1.bf16.msra.mxu0 0
        %327 = vmatprep.subr.bf16.mxu0 0
        %328 = vmatpush1.bf16.msra.mxu0 0
        %329 = vmatprep.subr.bf16.mxu0 0
        %330 = vmatpush1.bf16.msra.mxu0 0
        %331 = vmatprep.mubr.bf16.mxu0 0
        %332 = vmatmul.mubr.bf16.gmra.mrb[0].mxu0 %v228
        %v333 = vpop.f32.mrb[0].mxu0
        %v334 = vadd.f32 %v181, %v333
        %v335 = vpop.f32.mrb[0].mxu0
        %v336 = vadd.f32 %v181, %v335
        %v337 = vpop.f32.mrb[0].mxu0
        %v338 = vadd.f32 %v186, %v337
        %v339 = vpop.f32.mrb[0].mxu0
        %v340 = vadd.f32 %v186, %v339
        %341 = vmatprep.mubr.bf16.mxu0 0
        %342 = vmatmul.mubr.bf16.gmra.mrb[0].mxu0 %v231
        %v343 = vpop.f32.mrb[0].mxu0
        %v344 = vadd.f32 %v191, %v343
        %v345 = vpop.f32.mrb[0].mxu0
        %v346 = vadd.f32 %v191, %v345
        %v347 = vpop.f32.mrb[0].mxu0
        %v348 = vadd.f32 %v196, %v347
        %v349 = vpop.f32.mrb[0].mxu0
        %v350 = vadd.f32 %v196, %v349
        %351 = vdwg.mxu0
        %v352 = vpack.c.bf16 %v285, %v281
        %v353 = vpack.c.bf16 %v287, %v283
        %v354 = vpack.c.bf16 %v338, %v334
        %v355 = vpack.c.bf16 %v340, %v336
        %v356 = vpack.c.bf16 %v295, %v291
        %v357 = vpack.c.bf16 %v297, %v293
        %v358 = vpack.c.bf16 %v348, %v344
        %v359 = vpack.c.bf16 %v350, %v346
        %v368 = vunpack.c.l.b16 %v352
        %v369 = vunpack.c.l.b16 %v353
        %v370 = vunpack.c.l.b16 %v354
        %v371 = vunpack.c.l.b16 %v355
        %v372 = vunpack.c.h.b16 %v352
        %v373 = vunpack.c.h.b16 %v353
        %v374 = vunpack.c.h.b16 %v354
        %v375 = vunpack.c.h.b16 %v355
        %v376 = vunpack.c.l.b16 %v356
        %v377 = vunpack.c.l.b16 %v357
        %v378 = vunpack.c.l.b16 %v358
        %v379 = vunpack.c.l.b16 %v359
        %v380 = vunpack.c.h.b16 %v356
        %v381 = vunpack.c.h.b16 %v357
        %v382 = vunpack.c.h.b16 %v358
        %v383 = vunpack.c.h.b16 %v359
        %v384 = vpack.c.b16 %v369, %v368
        %v385 = vpack.c.b16 %v371, %v370
        %v386 = vpack.c.b16 %v373, %v372
        %v387 = vpack.c.b16 %v375, %v374
        %v388 = vpack.c.b16 %v377, %v376
        %v389 = vpack.c.b16 %v379, %v378
        %v390 = vpack.c.b16 %v381, %v380
        %v391 = vpack.c.b16 %v383, %v382
        %400 = vst [vmem:[%s160] sm:$0xff] %v384
        %401 = vst [vmem:[%s160 + $0x8] sm:$0xff] %v385
        %402 = vst [vmem:[%s160 + $0x10] sm:$0xff] %v386
        %403 = vst [vmem:[%s160 + $0x18] sm:$0xff] %v387
        %404 = vst [vmem:[%s160 + $0x20] sm:$0xff] %v388
        %405 = vst [vmem:[%s160 + $0x28] sm:$0xff] %v389
        %406 = vst [vmem:[%s160 + $0x30] sm:$0xff] %v390
        %407 = vst [vmem:[%s160 + $0x38] sm:$0xff] %v391
        %s408 = sand.u32 %s90, 1
        %s409 = sand.u32 %s90, 1
        %s410 = smul.addr %s409, 64
        %s411 = scalar_lea.vmem [#allocation2], %s410
        // Predicated region
        $region33: #{deconv_block_forward.1} parent=31 // pred_check
          %p412 = pneg %p100
        $region34: #{deconv_block_forward.1} parent=31 // pred_check_branch
          %414 = sbr.rel (%p412) target = $region36
        $region35: #{deconv_block_forward.1} parent=31 // pred_region
          %s415 = smul.u32 4, %s14
          %s416 = smul.addr %s415, 4
          %s417 = scalar_lea.vmem %s3, %s416
          // Predicated region
          $region37: #{deconv_block_forward.1} parent=35 // pred_check
            _
          $region38: #{deconv_block_forward.1} parent=35 // pred_check_branch
            %419 = sbr.rel (0) target = $region40
          $region39: #{deconv_block_forward.1} parent=35 // pred_region
            // Predicated region
            $region41: #{deconv_block_forward.1} parent=39 // pred_check
              _
            $region42: #{deconv_block_forward.1} parent=39 // pred_check_branch
              %421 = sbr.rel (0) target = $region44
            $region43: #{deconv_block_forward.1} parent=39 // pred_region
              loop: start=0, step=1, limit=1
              $region45: #{deconv_block_forward.1} parent=43 // loop_pre_header
                _
              $region46: #{deconv_block_forward.1} parent=43 // loop_header
                %s423 = sphi 0, %s427
                %p424 = scmp.ge.s32.totalorder %s423, 1
                %s428 = sphi %s411, %s411
                %s429 = sphi %s417, %s417
              $region47: #{deconv_block_forward.1} parent=43 // loop_header_branch
                %426 = sbr.rel (%p424) target = $region51
              $region48: #{deconv_block_forward.1} parent=43 // loop_body
                %v430 = vld [vmem:[%s428] sm:$0xff]
                %431 = vst [vmem:[%s429] sm:$0xff] %v430
                %v432 = vld [vmem:[%s428 + $0x8] sm:$0xff]
                %433 = vst [vmem:[%s429 + $0x8] sm:$0xff] %v432
                %v434 = vld [vmem:[%s428 + $0x10] sm:$0xff]
                %435 = vst [vmem:[%s429 + $0x20] sm:$0xff] %v434
                %v436 = vld [vmem:[%s428 + $0x18] sm:$0xff]
                %437 = vst [vmem:[%s429 + $0x28] sm:$0xff] %v436
                %v438 = vld [vmem:[%s428 + $0x20] sm:$0xff]
                %439 = vst [vmem:[%s429 + $0x40] sm:$0xff] %v438
                %v440 = vld [vmem:[%s428 + $0x28] sm:$0xff]
                %441 = vst [vmem:[%s429 + $0x48] sm:$0xff] %v440
                %v442 = vld [vmem:[%s428 + $0x30] sm:$0xff]
                %443 = vst [vmem:[%s429 + $0x60] sm:$0xff] %v442
                %v444 = vld [vmem:[%s428 + $0x38] sm:$0xff]
                %445 = vst [vmem:[%s429 + $0x68] sm:$0xff] %v444
              $region49: #{deconv_block_forward.1} parent=43 // loop_footer
                %s427 = sadd.s32 1, %s423
              $region50: #{deconv_block_forward.1} parent=43 // loop_footer_branch
                %422 = sbr.rel target = $region46
              $region51: #{deconv_block_forward.1} parent=43 // loop_exit
                _
            $region44: #{deconv_block_forward.1} parent=39 // pred_fallthru
              _
            // Predicated region
            $region52: #{deconv_block_forward.1} parent=39 // pred_check
              _
            $region53: #{deconv_block_forward.1} parent=39 // pred_check_branch
              %447 = sbr.rel target = $region55
            $region54: #{deconv_block_forward.1} parent=39 // pred_region
              _
            $region55: #{deconv_block_forward.1} parent=39 // pred_fallthru
              _
          $region40: #{deconv_block_forward.1} parent=35 // pred_fallthru
            _
          %448 = vnop
        $region36: #{deconv_block_forward.1} parent=31 // pred_fallthru
          _
      $region32: #{deconv_block_forward.1} parent=5 // pred_fallthru
        _
      %p449 = scmp.le.s32.totalorder 2, %s9
      // Predicated region
      $region56: #{deconv_block_forward.1} parent=5 // pred_check
        %p450 = pneg %p449
      $region57: #{deconv_block_forward.1} parent=5 // pred_check_branch
        %452 = sbr.rel (%p450) target = $region59
      $region58: #{deconv_block_forward.1} parent=5 // pred_region
        %s453 = ssub.s32 %s9, 2
        // Predicated region
        $region60: #{deconv_block_forward.1} parent=58 // pred_check
          %p454 = pneg %p106
        $region61: #{deconv_block_forward.1} parent=58 // pred_check_branch
          %456 = sbr.rel (%p454) target = $region63
        $region62: #{deconv_block_forward.1} parent=58 // pred_region
          %s457 = sand.u32 %s91, 1
          %s458 = sand.u32 %s91, 1
          %s459 = smul.addr %s458, 64
          %s460 = scalar_lea.vmem [#allocation2], %s459
        $region63: #{deconv_block_forward.1} parent=58 // pred_fallthru
          _
      $region59: #{deconv_block_forward.1} parent=5 // pred_fallthru
        _
    $region6: #{deconv_block_forward.1} parent=1 // loop_footer
      %s13 = sadd.s32 1, %s9
    $region7: #{deconv_block_forward.1} parent=1 // loop_footer_branch
      %8 = sbr.rel target = $region3
    $region8: #{deconv_block_forward.1} parent=1 // loop_exit
      _

</llo_original>
